<compile_context>
chip_gen: v7x
topology: tpu7x:2x2x1
jax: 0.10.0
libtpu: 0.0.40
codegen_flags: <defaults>
</compile_context>

<pallas_src>
import functools

import jax
import jax.numpy as jnp
from jax.experimental import pallas as pl
from jax.experimental.pallas import tpu as pltpu


def _round_up(n, m):
    return ((n + m - 1) // m) * m


def critic_kernel(x_ref, w_in_ref, w2h_ref, w3_ref, b3_ref, o_ref, *, h1):
    """One batch tile: x_ref (TM, D_in) -> o_ref (1, TM)."""
    x = x_ref[...]                                               # (TM, D_in)

    # One fused MXU matmul against the packed augmented weights:
    #   z[:, :H1] = state @ W1 + b1          (fc1 pre-activation)
    #   z[:, H1:] = action @ W2a + b2        (fc2 contribution from action+bias)
    z = jnp.dot(x, w_in_ref[...], preferred_element_type=jnp.float32)

    a1 = jnp.maximum(z[:, :h1], 0.0).astype(w2h_ref.dtype)       # relu(fc1), (TM, H1)
    z2 = jnp.dot(a1, w2h_ref[...], preferred_element_type=jnp.float32) + z[:, h1:]
    h2 = jnp.maximum(z2, 0.0)                                    # relu(fc2), (TM, H2) f32

    # fc3 (out_features = 1): VPU multiply + lane reduction instead of an N=1
    # MXU matmul; write the per-tile result as a lane-dense (1, TM) row.
    y = jnp.sum(h2 * w3_ref[...], axis=-1)                       # (TM,)
    o_ref[...] = y[None, :] + b3_ref[...]                        # (1, TM)


def network_critic_forward(state, action, packed_params, *, block_m=512,
                           compute_dtype=jnp.float32):
    w_in, w2h, w3_row, b3_arr = packed_params
    B = state.shape[0]
    D_in = w_in.shape[0]
    H1 = w2h.shape[0]

    # Small batches -> single tile; large batches -> block_m-row tiles.
    TM = min(block_m, _round_up(B, 8))
    B_pad = _round_up(B, TM)

    # Augmented input: [state | action | 1]; padded batch rows are zeros (their
    # outputs are discarded below).
    x = jnp.concatenate(
        [state.astype(jnp.float32), action.astype(jnp.float32),
         jnp.ones((B, 1), jnp.float32)], axis=1)                 # (B, D_in)
    if B_pad != B:
        x = jnp.pad(x, ((0, B_pad - B), (0, 0)))

    # bf16 here is a ~2x MXU/DMA win on v6e/v7x; fc3 weight/bias stay f32 (VPU path).
    x = x.astype(compute_dtype)
    w_in = w_in.astype(compute_dtype)
    w2h = w2h.astype(compute_dtype)

    out = pl.pallas_call(
        functools.partial(critic_kernel, h1=H1),
        out_shape=jax.ShapeDtypeStruct((1, B_pad), jnp.float32),
        grid=(B_pad // TM,),
        in_specs=[
            pl.BlockSpec((TM, D_in), lambda i: (i, 0)),          # batch tile (pipelined)
            pl.BlockSpec(w_in.shape, lambda i: (0, 0)),          # resident weights
            pl.BlockSpec(w2h.shape, lambda i: (0, 0)),
            pl.BlockSpec(w3_row.shape, lambda i: (0, 0)),
            pl.BlockSpec(b3_arr.shape, lambda i: (0, 0)),
        ],
        out_specs=pl.BlockSpec((1, TM), lambda i: (0, i)),       # lane-dense output rows
        compiler_params=pltpu.CompilerParams(
            dimension_semantics=("parallel",)),
    )(x, w_in, w2h, w3_row, b3_arr)

    return out[0, :B].reshape(B, 1)


def init_params(key, state_size, action_size, hidden1=64 * 2 * 2, hidden2=32 * 2 * 2):
    """PyTorch-layout params (weights stored transposed as [in, out])."""
    ks = jax.random.split(key, 6)
    # Note: original hidden_init uses weight.size()[0] (== out_features) as fan_in.
    lim1 = 1.0 / jnp.sqrt(hidden1)
    lim2 = 1.0 / jnp.sqrt(hidden2)
    u = lambda k, shp, lo, hi: jax.random.uniform(k, shp, jnp.float32, lo, hi)
    w1 = u(ks[0], (state_size, hidden1), -lim1, lim1)
    b1 = u(ks[1], (hidden1,), -lim1, lim1)
    w2 = u(ks[2], (hidden1 + action_size, hidden2), -lim2, lim2)
    b2 = u(ks[3], (hidden2,), -lim2, lim2)
    w3 = u(ks[4], (hidden2,), -0.003, 0.003)
    b3 = u(ks[5], (), -0.003, 0.003)
    return (w1, b1, w2, b2, w3, b3)


def pack_params(params, state_size, action_size):
    """Pack PyTorch-layout params into the kernel's fused layout (5 buffers)."""
    w1, b1, w2, b2, w3, b3 = params
    H1, H2 = w1.shape[1], w2.shape[1]
    D_in = state_size + action_size + 1
    # Augmented layer-1 weight: rows [state -> W1 | action -> 0 | ones -> b1]
    w1_aug = jnp.zeros((D_in, H1), jnp.float32)
    w1_aug = w1_aug.at[:state_size].set(w1).at[-1].set(b1)
    # Augmented layer-2 "extra" weight: rows [state -> 0 | action -> W2a | ones -> b2]
    w2_aug = jnp.zeros((D_in, H2), jnp.float32)
    w2_aug = w2_aug.at[state_size:state_size + action_size].set(w2[H1:]).at[-1].set(b2)
    # Single packed RHS so the kernel needs only one MXU weight push for
    # everything that multiplies the augmented input.
    w_in = jnp.concatenate([w1_aug, w2_aug], axis=1)             # (D_in, H1 + H2)
    w2h = w2[:H1]                                                # (H1, H2)
    w3_row = w3.reshape(1, H2)                                   # fc3 as VPU row
    b3_arr = b3.reshape(1, 1)
    return (w_in, w2h, w3_row, b3_arr)


def _reference(state, action, params):
    """Plain-JAX reference implementing the PyTorch forward."""
    w1, b1, w2, b2, w3, b3 = params
    hi = jax.lax.Precision.HIGHEST
    h1 = jnp.maximum(jnp.dot(state, w1, precision=hi) + b1, 0.0)
    cat = jnp.concatenate([h1, action], axis=1)
    h2 = jnp.maximum(jnp.dot(cat, w2, precision=hi) + b2, 0.0)
    return jnp.dot(h2, w3.reshape(-1, 1), precision=hi) + b3


if __name__ == "__main__":
    state_size, action_size = 24, 4
    key = jax.random.PRNGKey(0)
    k_s, k_a, k_p, k_s2, k_a2 = jax.random.split(key, 5)
    params = init_params(k_p, state_size, action_size)
    packed = pack_params(params, state_size, action_size)

    # Small single-tile case (B=8).
    B = 8
    state = jax.random.normal(k_s, (B, state_size), jnp.float32)
    action = jax.random.normal(k_a, (B, action_size), jnp.float32)
    out = jax.block_until_ready(network_critic_forward(state, action, packed))
    ref = _reference(state, action, params)
    assert out.shape == (B, 1), out.shape
    assert jnp.allclose(out, ref, atol=1e-3, rtol=1e-3), "mismatch vs reference (B=8)"

    # B=300 with the default block size: collapses to one (304-row) tile.
    B2 = 300
    state2 = jax.random.normal(k_s2, (B2, state_size), jnp.float32)
    action2 = jax.random.normal(k_a2, (B2, action_size), jnp.float32)
    out2 = jax.block_until_ready(network_critic_forward(state2, action2, packed))
    ref2 = _reference(state2, action2, params)
    assert out2.shape == (B2, 1), out2.shape
    assert jnp.allclose(out2, ref2, atol=1e-3, rtol=1e-3), "mismatch vs reference (B=300)"

    # Same data with block_m=128: exercises the multi-tile parallel grid + padding
    # (TM=128, 3 tiles, 84 padded rows discarded).
    out3 = jax.block_until_ready(
        network_critic_forward(state2, action2, packed, block_m=128))
    assert out3.shape == (B2, 1), out3.shape
    assert jnp.allclose(out3, ref2, atol=1e-3, rtol=1e-3), "mismatch vs reference (tiled)"

    print("KERNEL_OK")
</pallas_src>

<mosaic_0001>
module attributes {stable_mosaic.version = 11 : i64} {
  func.func @critic_kernel(%arg0: i32, %arg1: memref<8x29xf32, #tpu.memory_space<vmem>>, %arg2: memref<29x384xf32, #tpu.memory_space<vmem>>, %arg3: memref<256x128xf32, #tpu.memory_space<vmem>>, %arg4: memref<1x128xf32, #tpu.memory_space<vmem>>, %arg5: memref<1x1xf32, #tpu.memory_space<vmem>>, %arg6: memref<1x8xf32, #tpu.memory_space<vmem>>) attributes {dimension_semantics = [#tpu.dimension_semantics<parallel>], iteration_bounds = array<i64: 1>, scalar_prefetch = 0 : i64, scratch_operands = 0 : i64, tpu.core_type = #tpu.core_type<tc>, window_params = [{transform_indices = @transform_0, window_bounds = array<i64: 8, 29>}, {pipeline_mode = #tpu.pipeline_mode<synchronous>, transform_indices = @transform_1, window_bounds = array<i64: 29, 384>}, {pipeline_mode = #tpu.pipeline_mode<synchronous>, transform_indices = @transform_2, window_bounds = array<i64: 256, 128>}, {pipeline_mode = #tpu.pipeline_mode<synchronous>, transform_indices = @transform_3, window_bounds = array<i64: 1, 128>}, {pipeline_mode = #tpu.pipeline_mode<synchronous>, transform_indices = @transform_4, window_bounds = array<i64: 1, 1>}, {transform_indices = @transform_5, window_bounds = array<i64: 1, 8>}]} {
    %c0 = arith.constant 0 : index
    %c0_0 = arith.constant 0 : index
    %0 = vector.load %arg1[%c0, %c0_0] : memref<8x29xf32, #tpu.memory_space<vmem>>, vector<8x29xf32>
    %c0_1 = arith.constant 0 : index
    %c0_2 = arith.constant 0 : index
    %1 = vector.load %arg2[%c0_1, %c0_2] : memref<29x384xf32, #tpu.memory_space<vmem>>, vector<29x384xf32>
    %cst = arith.constant dense<0.000000e+00> : vector<8x384xf32>
    %2 = tpu.matmul %0, %1, %cst {dimension_numbers = #tpu.dot_dimension_numbers<[1], [0], [0], [1], [0, 0, 1, 1], [], []>} : vector<8x29xf32>, vector<29x384xf32>, vector<8x384xf32> -> vector<8x384xf32>
    %3 = vector.extract_strided_slice %2 {offsets = [0, 0], sizes = [8, 256], strides = [1, 1]} : vector<8x384xf32> to vector<8x256xf32>
    %cst_3 = arith.constant 0.000000e+00 : f32
    %4 = vector.broadcast %cst_3 : f32 to vector<8x256xf32>
    %5 = arith.maximumf %3, %4 : vector<8x256xf32>
    %c0_4 = arith.constant 0 : index
    %c0_5 = arith.constant 0 : index
    %6 = vector.load %arg3[%c0_4, %c0_5] : memref<256x128xf32, #tpu.memory_space<vmem>>, vector<256x128xf32>
    %cst_6 = arith.constant dense<0.000000e+00> : vector<8x128xf32>
    %7 = tpu.matmul %5, %6, %cst_6 {dimension_numbers = #tpu.dot_dimension_numbers<[1], [0], [0], [1], [0, 0, 1, 1], [], []>} : vector<8x256xf32>, vector<256x128xf32>, vector<8x128xf32> -> vector<8x128xf32>
    %8 = vector.extract_strided_slice %2 {offsets = [0, 256], sizes = [8, 128], strides = [1, 1]} : vector<8x384xf32> to vector<8x128xf32>
    %9 = arith.addf %7, %8 : vector<8x128xf32>
    %cst_7 = arith.constant 0.000000e+00 : f32
    %10 = vector.broadcast %cst_7 : f32 to vector<8x128xf32>
    %11 = arith.maximumf %9, %10 : vector<8x128xf32>
    %c0_8 = arith.constant 0 : index
    %c0_9 = arith.constant 0 : index
    %12 = vector.load %arg4[%c0_8, %c0_9] : memref<1x128xf32, #tpu.memory_space<vmem>>, vector<1x128xf32>
    %13 = vector.broadcast %12 : vector<1x128xf32> to vector<8x128xf32>
    %14 = arith.mulf %11, %13 : vector<8x128xf32>
    %cst_10 = arith.constant dense<0.000000e+00> : vector<8xf32>
    %15 = vector.multi_reduction <add>, %14, %cst_10 [1] : vector<8x128xf32> to vector<8xf32>
    %16 = vector.shape_cast %15 : vector<8xf32> to vector<1x8xf32>
    %c0_11 = arith.constant 0 : index
    %c0_12 = arith.constant 0 : index
    %17 = vector.load %arg5[%c0_11, %c0_12] : memref<1x1xf32, #tpu.memory_space<vmem>>, vector<1x1xf32>
    %18 = vector.broadcast %17 : vector<1x1xf32> to vector<1x8xf32>
    %19 = arith.addf %16, %18 : vector<1x8xf32>
    %c0_13 = arith.constant 0 : index
    %c0_14 = arith.constant 0 : index
    %20 = vector.load %arg6[%c0_13, %c0_14] : memref<1x8xf32, #tpu.memory_space<vmem>>, vector<1x8xf32>
    tpu.vector_store %arg6[%c0_13, %c0_14], %19 {strides = array<i32>} : memref<1x8xf32, #tpu.memory_space<vmem>>, vector<1x8xf32>,
    return
  }
  func.func @transform_0(%arg0: i32) -> (i32, i32) {
    %c0_i32 = arith.constant 0 : i32
    %c0_i32_0 = arith.constant 0 : i32
    return %arg0, %c0_i32 : i32, i32
  }
  func.func @transform_1(%arg0: i32) -> (i32, i32) {
    %c0_i32 = arith.constant 0 : i32
    %c0_i32_0 = arith.constant 0 : i32
    %c0_i32_1 = arith.constant 0 : i32
    return %c0_i32, %c0_i32_0 : i32, i32
  }
  func.func @transform_2(%arg0: i32) -> (i32, i32) {
    %c0_i32 = arith.constant 0 : i32
    %c0_i32_0 = arith.constant 0 : i32
    %c0_i32_1 = arith.constant 0 : i32
    return %c0_i32, %c0_i32_0 : i32, i32
  }
  func.func @transform_3(%arg0: i32) -> (i32, i32) {
    %c0_i32 = arith.constant 0 : i32
    %c0_i32_0 = arith.constant 0 : i32
    %c0_i32_1 = arith.constant 0 : i32
    return %c0_i32, %c0_i32_0 : i32, i32
  }
  func.func @transform_4(%arg0: i32) -> (i32, i32) {
    %c0_i32 = arith.constant 0 : i32
    %c0_i32_0 = arith.constant 0 : i32
    %c0_i32_1 = arith.constant 0 : i32
    return %c0_i32, %c0_i32_0 : i32, i32
  }
  func.func @transform_5(%arg0: i32) -> (i32, i32) {
    %c0_i32 = arith.constant 0 : i32
    %c0_i32_0 = arith.constant 0 : i32
    return %c0_i32, %arg0 : i32, i32
  }
}

</mosaic_0001>

<llo_original>
// kernel: tpu_custom_call.1
$region0: #{tpu_custom_call.1}
  #allocation0 [shape = 'u32[]', space=smem, size = 0x4, offset = 0x4, fixed_abs, tag = 'smem constant byte address 0x4 - core index']
  #allocation1 [shape = 'u32[144,128]{1,0:T(1,128)}', space=vmem, size = 0x12000, scoped, tag = 'internal scratch']
  #allocation2 [shape = 'f32[1,1]{1,0:T(1,128)S(1)}', space=vmem, size = 0x200, scoped, tag = 'scoped memory for tpu_custom_call.1']
  %s0 = inlined_call_operand.hbm [shape: f32[8,29], index: 0, kind: input, shape index: {}]
  %s1 = inlined_call_operand.hbm [shape: f32[29,384], index: 1, kind: input, shape index: {}]
  %s2 = inlined_call_operand.hbm [shape: f32[256,128], index: 2, kind: input, shape index: {}]
  %s3 = inlined_call_operand.vmem [shape: f32[1,128], index: 3, kind: input, shape index: {}]
  %s4 = inlined_call_operand.<no memory space> [shape: f32[1,1], index: 4, kind: input, shape index: {}]
  %s5 = inlined_call_operand.hbm [shape: f32[1,8], index: 5, kind: output, shape index: {}]
  %s6 = sld [smem:[#allocation0]]
  $region42: #{tpu_custom_call.1} parent=0
    _
  %s8 = ssub.s32 1, %s6
  %s9 = scalar_select 0, %s8, %s6
  %v10 = vstv %s4
  %11 = vst [vmem:[#allocation2] sm:$0x1] %v10
  $region1: #{tpu_custom_call.1} parent=0
    #allocation3 [shape = 'u8[4096]{0}', space=vmem, size = 0x1000, scoped, tag = 'input window, operand 0, single buffered']
    #allocation4 [shape = 's32[1]{0}', space=sflag, size = 0x4, scoped, tag = 'scoped memory for tpu_custom_call.1']
    #allocation5 [shape = 's32[1]{0}', space=sflag, size = 0x4, scoped, tag = 'scoped memory for tpu_custom_call.1']
    #allocation6 [shape = 'u8[49152]{0}', space=vmem, size = 0xc000, scoped, tag = 'input window, operand 1, single buffered']
    #allocation7 [shape = 's32[1]{0}', space=sflag, size = 0x4, scoped, tag = 'scoped memory for tpu_custom_call.1']
    #allocation8 [shape = 'u8[131072]{0}', space=vmem, size = 0x20000, scoped, tag = 'input window, operand 2, single buffered']
    #allocation9 [shape = 'u8[512]{0}', space=vmem, size = 0x400, scoped, tag = 'output window, operand 0, single buffered']
    %12 = vsyncpa [#allocation4], 0
    %13 = vsyncpa [#allocation7], 0
    %14 = vsyncpa [#allocation5], 0
    // Predicated region
    $region2: #{tpu_custom_call.1} parent=1 // pred_check
      _
    $region3: #{tpu_custom_call.1} parent=1 // pred_check_branch
      %16 = sbr.rel (0) target = $region5
    $region4: #{tpu_custom_call.1} parent=1 // pred_region
      %s18 = ssub.s32 128, 128
      %19 = vsyncadd [#allocation4], %s18
      %s21 = sshll.u32 [#allocation3], 4
      %s22 = int_to_ptr.vmem [resolvable:$true] %s21
      %24 = dma.hbm_to_vmem [thread:$0]  %s0, 128, %s22, [#allocation4]
    $region5: #{tpu_custom_call.1} parent=1 // pred_fallthru
      _
    // Predicated region
    $region6: #{tpu_custom_call.1} parent=1 // pred_check
      _
    $region7: #{tpu_custom_call.1} parent=1 // pred_check_branch
      %26 = sbr.rel (0) target = $region9
    $region8: #{tpu_custom_call.1} parent=1 // pred_region
      %s28 = ssub.s32 1536, 1536
      %29 = vsyncadd [#allocation7], %s28
      %s30 = sshll.u32 [#allocation6], 4
      %s31 = int_to_ptr.vmem [resolvable:$true] %s30
      %36 = dma.hbm_to_vmem [thread:$0]  %s1, 1536, %s31, [#allocation7], 384, 384, 24
    $region9: #{tpu_custom_call.1} parent=1 // pred_fallthru
      _
    // Predicated region
    $region10: #{tpu_custom_call.1} parent=1 // pred_check
      _
    $region11: #{tpu_custom_call.1} parent=1 // pred_check_branch
      %38 = sbr.rel (0) target = $region13
    $region12: #{tpu_custom_call.1} parent=1 // pred_region
      %s40 = ssub.s32 4096, 4096
      %41 = vsyncadd [#allocation7], %s40
      %s42 = sshll.u32 [#allocation8], 4
      %s43 = int_to_ptr.vmem [resolvable:$true] %s42
      %48 = dma.hbm_to_vmem [thread:$0]  %s2, 4096, %s43, [#allocation7], 128, 128, 8
    $region13: #{tpu_custom_call.1} parent=1 // pred_fallthru
      _
    // Predicated region
    $region14: #{tpu_custom_call.1} parent=1 // pred_check
      _
    $region15: #{tpu_custom_call.1} parent=1 // pred_check_branch
      %50 = sbr.rel (0) target = $region17
    $region16: #{tpu_custom_call.1} parent=1 // pred_region
      _
    $region17: #{tpu_custom_call.1} parent=1 // pred_fallthru
      _
    // Predicated region
    $region18: #{tpu_custom_call.1} parent=1 // pred_check
      _
    $region19: #{tpu_custom_call.1} parent=1 // pred_check_branch
      %52 = sbr.rel (0) target = $region21
    $region20: #{tpu_custom_call.1} parent=1 // pred_region
      _
    $region21: #{tpu_custom_call.1} parent=1 // pred_fallthru
      _
    // Predicated region
    $region22: #{tpu_custom_call.1} parent=1 // pred_check
      _
    $region23: #{tpu_custom_call.1} parent=1 // pred_check_branch
      %54 = sbr.rel (0) target = $region25
    $region24: #{tpu_custom_call.1} parent=1 // pred_region
      %55 = dma.done [#allocation4], 128
    $region25: #{tpu_custom_call.1} parent=1 // pred_fallthru
      _
    // Predicated region
    $region26: #{tpu_custom_call.1} parent=1 // pred_check
      _
    $region27: #{tpu_custom_call.1} parent=1 // pred_check_branch
      %57 = sbr.rel (0) target = $region29
    $region28: #{tpu_custom_call.1} parent=1 // pred_region
      %58 = dma.done [#allocation7], 1536
    $region29: #{tpu_custom_call.1} parent=1 // pred_fallthru
      _
    // Predicated region
    $region30: #{tpu_custom_call.1} parent=1 // pred_check
      _
    $region31: #{tpu_custom_call.1} parent=1 // pred_check_branch
      %60 = sbr.rel (0) target = $region33
    $region32: #{tpu_custom_call.1} parent=1 // pred_region
      %61 = dma.done [#allocation7], 4096
    $region33: #{tpu_custom_call.1} parent=1 // pred_fallthru
      _
    %v62 = vld [vmem:[#allocation3] sm:$0xff]
    %v63 = vld [vmem:[#allocation6] sm:$0xff]
    %v64 = vld [vmem:[#allocation6 + $0x8] sm:$0xff]
    %v65 = vld [vmem:[#allocation6 + $0x10] sm:$0xff]
    %v66 = vld [vmem:[#allocation6 + $0x18] sm:$0xff]
    %v67 = vld [vmem:[#allocation6 + $0x20] sm:$0xff]
    %v68 = vld [vmem:[#allocation6 + $0x28] sm:$0xff]
    %v69 = vld [vmem:[#allocation6 + $0x30] sm:$0xff]
    %v70 = vld [vmem:[#allocation6 + $0x38] sm:$0xff]
    %v71 = vld [vmem:[#allocation6 + $0x40] sm:$0xff]
    %v72 = vld [vmem:[#allocation6 + $0x48] sm:$0x1f]
    %v73 = vld [vmem:[#allocation6 + $0x50] sm:$0x1f]
    %v74 = vld [vmem:[#allocation6 + $0x58] sm:$0x1f]
    %vm75 = vcmask 236544
    %v77 = vsel %vm75, %v62, 0
    %vm79 = vcmask 1044480
    %v81 = vsel %vm79, %v72, 0
    %v84 = vsel %vm79, %v73, 0
    %v87 = vsel %vm79, %v74, 0
    %89 = vmatprep.subr.mxu0 %v64
    %90 = vmatpush1.msra.mxu0 %v63
    %91 = vmatprep.subr.mxu0 %v67
    %92 = vmatpush1.msra.mxu0 %v66
    %93 = vmatprep.subr.mxu0 %v70
    %94 = vmatpush1.msra.mxu0 %v69
    %95 = vmatprep.subr.mxu0 %v84
    %96 = vmatpush1.msra.mxu0 %v81
    %97 = vmatprep.subr.mxu0 0.0
    %98 = vmatpush1.msra.mxu0 0.0
    %99 = vmatprep.subr.mxu0 0.0
    %100 = vmatpush1.msra.mxu0 0.0
    %101 = vmatprep.subr.mxu0 0.0
    %102 = vmatpush1.msra.mxu0 0.0
    %103 = vmatprep.subr.mxu0 0.0
    %104 = vmatpush1.msra.mxu0 0.0
    %105 = vmatprep.subr.mxu0 0.0
    %106 = vmatpush1.msra.mxu0 0.0
    %107 = vmatprep.subr.mxu0 0.0
    %108 = vmatpush1.msra.mxu0 0.0
    %109 = vmatprep.subr.mxu0 0.0
    %110 = vmatpush1.msra.mxu0 0.0
    %111 = vmatprep.subr.mxu0 0.0
    %112 = vmatpush1.msra.mxu0 0.0
    %113 = vmatprep.subr.mxu0 0.0
    %114 = vmatpush1.msra.mxu0 0.0
    %115 = vmatprep.subr.mxu0 0.0
    %116 = vmatpush1.msra.mxu0 0.0
    %117 = vmatprep.subr.mxu0 0.0
    %118 = vmatpush1.msra.mxu0 0.0
    %119 = vmatprep.subr.mxu0 0.0
    %120 = vmatpush1.msra.mxu0 0.0
    %121 = vmatprep.subr.mxu0 0.0
    %122 = vmatpush1.msra.mxu0 0.0
    %123 = vmatprep.subr.mxu0 0.0
    %124 = vmatpush1.msra.mxu0 0.0
    %125 = vmatprep.subr.mxu0 0.0
    %126 = vmatpush1.msra.mxu0 0.0
    %127 = vmatprep.subr.mxu0 0.0
    %128 = vmatpush1.msra.mxu0 0.0
    %129 = vmatprep.subr.mxu0 0.0
    %130 = vmatpush1.msra.mxu0 0.0
    %131 = vmatprep.subr.mxu0 0.0
    %132 = vmatpush1.msra.mxu0 0.0
    %133 = vmatprep.subr.mxu0 0.0
    %134 = vmatpush1.msra.mxu0 0.0
    %135 = vmatprep.subr.mxu0 0.0
    %136 = vmatpush1.msra.mxu0 0.0
    %137 = vmatprep.subr.mxu0 0.0
    %138 = vmatpush1.msra.mxu0 0.0
    %139 = vmatprep.subr.mxu0 0.0
    %140 = vmatpush1.msra.mxu0 0.0
    %141 = vmatprep.subr.mxu0 0.0
    %142 = vmatpush1.msra.mxu0 0.0
    %143 = vmatprep.subr.mxu0 0.0
    %144 = vmatpush1.msra.mxu0 0.0
    %145 = vmatprep.subr.mxu0 0.0
    %146 = vmatpush1.msra.mxu0 0.0
    %147 = vmatprep.subr.mxu0 0.0
    %148 = vmatpush1.msra.mxu0 0.0
    %149 = vmatprep.subr.mxu0 0.0
    %150 = vmatpush1.msra.mxu0 0.0
    %151 = vmatprep.subr.mxu0 0.0
    %152 = vmatpush1.msra.mxu0 0.0
    %153 = vmatprep.mubr.f32.mxu0 0.0
    %154 = vmatmul.mubr.f32.gmra.mrb[0].mxu0 %v77
    %v155 = vpop.f32.mrb[0].mxu0
    %v156 = vadd.f32 0.0, %v155
    %v157 = vpop.f32.mrb[0].mxu0
    %v158 = vadd.f32 0.0, %v157
    %159 = vdwg.mxu0
    %160 = vmatprep.subr.mxu0 0.0
    %161 = vmatpush1.msra.mxu0 %v65
    %162 = vmatprep.subr.mxu0 0.0
    %163 = vmatpush1.msra.mxu0 %v68
    %164 = vmatprep.subr.mxu0 0.0
    %165 = vmatpush1.msra.mxu0 %v71
    %166 = vmatprep.subr.mxu0 0.0
    %167 = vmatpush1.msra.mxu0 %v87
    %168 = vmatprep.subr.mxu0 0.0
    %169 = vmatpush1.msra.mxu0 0.0
    %170 = vmatprep.subr.mxu0 0.0
    %171 = vmatpush1.msra.mxu0 0.0
    %172 = vmatprep.subr.mxu0 0.0
    %173 = vmatpush1.msra.mxu0 0.0
    %174 = vmatprep.subr.mxu0 0.0
    %175 = vmatpush1.msra.mxu0 0.0
    %176 = vmatprep.subr.mxu0 0.0
    %177 = vmatpush1.msra.mxu0 0.0
    %178 = vmatprep.subr.mxu0 0.0
    %179 = vmatpush1.msra.mxu0 0.0
    %180 = vmatprep.subr.mxu0 0.0
    %181 = vmatpush1.msra.mxu0 0.0
    %182 = vmatprep.subr.mxu0 0.0
    %183 = vmatpush1.msra.mxu0 0.0
    %184 = vmatprep.subr.mxu0 0.0
    %185 = vmatpush1.msra.mxu0 0.0
    %186 = vmatprep.subr.mxu0 0.0
    %187 = vmatpush1.msra.mxu0 0.0
    %188 = vmatprep.subr.mxu0 0.0
    %189 = vmatpush1.msra.mxu0 0.0
    %190 = vmatprep.subr.mxu0 0.0
    %191 = vmatpush1.msra.mxu0 0.0
    %192 = vmatprep.subr.mxu0 0.0
    %193 = vmatpush1.msra.mxu0 0.0
    %194 = vmatprep.subr.mxu0 0.0
    %195 = vmatpush1.msra.mxu0 0.0
    %196 = vmatprep.subr.mxu0 0.0
    %197 = vmatpush1.msra.mxu0 0.0
    %198 = vmatprep.subr.mxu0 0.0
    %199 = vmatpush1.msra.mxu0 0.0
    %200 = vmatprep.subr.mxu0 0.0
    %201 = vmatpush1.msra.mxu0 0.0
    %202 = vmatprep.subr.mxu0 0.0
    %203 = vmatpush1.msra.mxu0 0.0
    %204 = vmatprep.subr.mxu0 0.0
    %205 = vmatpush1.msra.mxu0 0.0
    %206 = vmatprep.subr.mxu0 0.0
    %207 = vmatpush1.msra.mxu0 0.0
    %208 = vmatprep.subr.mxu0 0.0
    %209 = vmatpush1.msra.mxu0 0.0
    %210 = vmatprep.subr.mxu0 0.0
    %211 = vmatpush1.msra.mxu0 0.0
    %212 = vmatprep.subr.mxu0 0.0
    %213 = vmatpush1.msra.mxu0 0.0
    %214 = vmatprep.subr.mxu0 0.0
    %215 = vmatpush1.msra.mxu0 0.0
    %216 = vmatprep.subr.mxu0 0.0
    %217 = vmatpush1.msra.mxu0 0.0
    %218 = vmatprep.subr.mxu0 0.0
    %219 = vmatpush1.msra.mxu0 0.0
    %220 = vmatprep.subr.mxu0 0.0
    %221 = vmatpush1.msra.mxu0 0.0
    %222 = vmatprep.subr.mxu0 0.0
    %223 = vmatpush1.msra.mxu0 0.0
    %224 = vmatprep.mubr.f32.mxu0 0.0
    %225 = vmatmul.mubr.f32.gmra.mrb[0].mxu0 %v77
    %v226 = vpop.f32.mrb[0].mxu0
    %v227 = vadd.f32 0.0, %v226
    %v228 = vpop.f32.mrb[0].mxu0
    %229 = vdwg.mxu0
    %v230 = vmax.f32 %v156, 0.0
    %v231 = vmax.f32 %v158, 0.0
    %v232 = vld [vmem:[#allocation8] sm:$0xff]
    %v233 = vld [vmem:[#allocation8 + $0x8] sm:$0xff]
    %v234 = vld [vmem:[#allocation8 + $0x10] sm:$0xff]
    %v235 = vld [vmem:[#allocation8 + $0x18] sm:$0xff]
    %v236 = vld [vmem:[#allocation8 + $0x20] sm:$0xff]
    %v237 = vld [vmem:[#allocation8 + $0x28] sm:$0xff]
    %v238 = vld [vmem:[#allocation8 + $0x30] sm:$0xff]
    %v239 = vld [vmem:[#allocation8 + $0x38] sm:$0xff]
    %v240 = vld [vmem:[#allocation8 + $0x40] sm:$0xff]
    %v241 = vld [vmem:[#allocation8 + $0x48] sm:$0xff]
    %v242 = vld [vmem:[#allocation8 + $0x50] sm:$0xff]
    %v243 = vld [vmem:[#allocation8 + $0x58] sm:$0xff]
    %v244 = vld [vmem:[#allocation8 + $0x60] sm:$0xff]
    %v245 = vld [vmem:[#allocation8 + $0x68] sm:$0xff]
    %v246 = vld [vmem:[#allocation8 + $0x70] sm:$0xff]
    %v247 = vld [vmem:[#allocation8 + $0x78] sm:$0xff]
    %v248 = vld [vmem:[#allocation8 + $0x80] sm:$0xff]
    %v249 = vld [vmem:[#allocation8 + $0x88] sm:$0xff]
    %v250 = vld [vmem:[#allocation8 + $0x90] sm:$0xff]
    %v251 = vld [vmem:[#allocation8 + $0x98] sm:$0xff]
    %v252 = vld [vmem:[#allocation8 + $0xa0] sm:$0xff]
    %v253 = vld [vmem:[#allocation8 + $0xa8] sm:$0xff]
    %v254 = vld [vmem:[#allocation8 + $0xb0] sm:$0xff]
    %v255 = vld [vmem:[#allocation8 + $0xb8] sm:$0xff]
    %v256 = vld [vmem:[#allocation8 + $0xc0] sm:$0xff]
    %v257 = vld [vmem:[#allocation8 + $0xc8] sm:$0xff]
    %v258 = vld [vmem:[#allocation8 + $0xd0] sm:$0xff]
    %v259 = vld [vmem:[#allocation8 + $0xd8] sm:$0xff]
    %v260 = vld [vmem:[#allocation8 + $0xe0] sm:$0xff]
    %v261 = vld [vmem:[#allocation8 + $0xe8] sm:$0xff]
    %v262 = vld [vmem:[#allocation8 + $0xf0] sm:$0xff]
    %v263 = vld [vmem:[#allocation8 + $0xf8] sm:$0xff]
    %264 = vmatprep.subr.mxu0 0.0
    %265 = vmatpush1.msra.mxu0 %v232
    %266 = vmatprep.subr.mxu0 0.0
    %267 = vmatpush1.msra.mxu0 %v233
    %268 = vmatprep.subr.mxu0 0.0
    %269 = vmatpush1.msra.mxu0 %v234
    %270 = vmatprep.subr.mxu0 0.0
    %271 = vmatpush1.msra.mxu0 %v235
    %272 = vmatprep.subr.mxu0 0.0
    %273 = vmatpush1.msra.mxu0 %v236
    %274 = vmatprep.subr.mxu0 0.0
    %275 = vmatpush1.msra.mxu0 %v237
    %276 = vmatprep.subr.mxu0 0.0
    %277 = vmatpush1.msra.mxu0 %v238
    %278 = vmatprep.subr.mxu0 0.0
    %279 = vmatpush1.msra.mxu0 %v239
    %280 = vmatprep.subr.mxu0 0.0
    %281 = vmatpush1.msra.mxu0 %v240
    %282 = vmatprep.subr.mxu0 0.0
    %283 = vmatpush1.msra.mxu0 %v241
    %284 = vmatprep.subr.mxu0 0.0
    %285 = vmatpush1.msra.mxu0 %v242
    %286 = vmatprep.subr.mxu0 0.0
    %287 = vmatpush1.msra.mxu0 %v243
    %288 = vmatprep.subr.mxu0 0.0
    %289 = vmatpush1.msra.mxu0 %v244
    %290 = vmatprep.subr.mxu0 0.0
    %291 = vmatpush1.msra.mxu0 %v245
    %292 = vmatprep.subr.mxu0 0.0
    %293 = vmatpush1.msra.mxu0 %v246
    %294 = vmatprep.subr.mxu0 0.0
    %295 = vmatpush1.msra.mxu0 %v247
    %296 = vmatprep.subr.mxu0 0.0
    %297 = vmatpush1.msra.mxu0 %v248
    %298 = vmatprep.subr.mxu0 0.0
    %299 = vmatpush1.msra.mxu0 %v249
    %300 = vmatprep.subr.mxu0 0.0
    %301 = vmatpush1.msra.mxu0 %v250
    %302 = vmatprep.subr.mxu0 0.0
    %303 = vmatpush1.msra.mxu0 %v251
    %304 = vmatprep.subr.mxu0 0.0
    %305 = vmatpush1.msra.mxu0 %v252
    %306 = vmatprep.subr.mxu0 0.0
    %307 = vmatpush1.msra.mxu0 %v253
    %308 = vmatprep.subr.mxu0 0.0
    %309 = vmatpush1.msra.mxu0 %v254
    %310 = vmatprep.subr.mxu0 0.0
    %311 = vmatpush1.msra.mxu0 %v255
    %312 = vmatprep.subr.mxu0 0.0
    %313 = vmatpush1.msra.mxu0 %v256
    %314 = vmatprep.subr.mxu0 0.0
    %315 = vmatpush1.msra.mxu0 %v257
    %316 = vmatprep.subr.mxu0 0.0
    %317 = vmatpush1.msra.mxu0 %v258
    %318 = vmatprep.subr.mxu0 0.0
    %319 = vmatpush1.msra.mxu0 %v259
    %320 = vmatprep.subr.mxu0 0.0
    %321 = vmatpush1.msra.mxu0 %v260
    %322 = vmatprep.subr.mxu0 0.0
    %323 = vmatpush1.msra.mxu0 %v261
    %324 = vmatprep.subr.mxu0 0.0
    %325 = vmatpush1.msra.mxu0 %v262
    %326 = vmatprep.subr.mxu0 0.0
    %327 = vmatpush1.msra.mxu0 %v263
    %328 = vmatprep.mubr.f32.mxu0 %v231
    %329 = vmatmul.mubr.f32.gmra.mrb[0].mxu0 %v230
    %v330 = vpop.f32.mrb[0].mxu0
    %v331 = vadd.f32 %v227, %v330
    %v332 = vpop.f32.mrb[0].mxu0
    %333 = vdwg.mxu0
    %v334 = vmax.f32 %v331, 0.0
    %v335 = vld [vmem:[%s3] sm:$0x1]
    %v337 = vlaneseq
    %v338 = vshrl.u32 %v337, 7
    %v339 = vsub.s32 0, %v338
    %v340 = vrot.slane %v335, %v339
    %v342 = vmul.f32 %v334, %v340
    %343 = vadd.xlane.f32.xlu0 %v342
    %v344 = vpop.xlane.xlu0 %343
    %v345 = vld [vmem:[#allocation2] sm:$0x1]
    %347 = vset.pattern.permute.xlu0 0
    %348 = vperm.xlu0 %347, %v345
    %v349 = vpop.permute.xlu0 %348
    %v351 = vlaneseq
    %v352 = vshrl.u32 %v351, 7
    %v353 = vsub.s32 0, %v352
    %v354 = vrot.slane %v349, %v353
    %v355 = vadd.f32 %v344, %v354
    %v357 = vlaneseq
    %v358 = vand.u32 %v357, 127
    %v359 = vlaneseq
    %v360 = vshrl.u32 %v359, 7
    %v361 = vsub.s32 %v358, %v360
    %v362 = vrot.slane %v355, %v361
    %vm364 = vcmask 57344
    %365 = vst.msk [vmem:[#allocation9] sm:$0x1] %vm364, %v362
    // Predicated region
    $region34: #{tpu_custom_call.1} parent=1 // pred_check
      _
    $region35: #{tpu_custom_call.1} parent=1 // pred_check_branch
      %367 = sbr.rel (0) target = $region37
    $region36: #{tpu_custom_call.1} parent=1 // pred_region
      %s369 = ssub.s32 16, 16
      %370 = vsyncadd [#allocation5], %s369
      %s372 = sshll.u32 [#allocation9], 4
      %s373 = int_to_ptr.vmem [resolvable:$true] %s372
      %375 = dma.vmem_to_hbm [thread:$0]  %s373, 16, %s5, [#allocation5]
    $region37: #{tpu_custom_call.1} parent=1 // pred_fallthru
      _
    // Predicated region
    $region38: #{tpu_custom_call.1} parent=1 // pred_check
      _
    $region39: #{tpu_custom_call.1} parent=1 // pred_check_branch
      %377 = sbr.rel (0) target = $region41
    $region40: #{tpu_custom_call.1} parent=1 // pred_region
      %378 = dma.done [#allocation5], 16
    $region41: #{tpu_custom_call.1} parent=1 // pred_fallthru
      _
    %379 = vsyncpa [#allocation4], 1
    %380 = vsyncpa [#allocation7], 1
    %381 = vsyncpa [#allocation5], 1

</llo_original>
